<compile_context>
chip_gen: v5e
topology: v5e:2x2
jax: 0.10.0
libtpu: 0.0.40
codegen_flags: <defaults>
</compile_context>

<pallas_src>
import jax
import jax.numpy as jnp
from jax.experimental import pallas as pl
from jax.experimental.pallas import tpu as pltpu

# ---------------- problem sizes (consistent with the module) ----------------
N_STATES = 2          # component.n_states
N_CTRL = 1            # component.n_control_inputs
N_VPARAM = 2          # voltage_profile.n_voltage_parameters
D_IN = 1 + N_STATES + N_STATES + N_CTRL + N_VPARAM   # time + x0 + dx0/dt + u + v = 8
HIDDEN = 32
D_OUT = N_STATES
D_OUT_PAD = 8         # output sublane rows (only first D_OUT=2 live; zero-padded weights)
NEURONS_IN_LAYERS = [D_IN, HIDDEN, HIDDEN, D_OUT]

LANE = 128
TB_MAX = 8192          # max batch columns per grid step (double-buffered tiles << 16 MiB)
SINGLE_STEP_MAX = 4096 # below this, one grid step beats splitting (0.35 us/step overhead)


# ------------------------------ Pallas kernel -------------------------------
def _mlp_kernel(x_ref, w1_ref, w2_ref, w3_ref, bias_ref, o_ref):
    # x_ref: (D_IN, tb)  batch on lanes, features on sublanes
    x = x_ref[...]
    # layer 1 (input standardisation folded into W1'/b1')
    h = jnp.dot(w1_ref[...], x, preferred_element_type=jnp.float32)      # (HIDDEN, tb)
    h = jnp.tanh(h + bias_ref[:, 0:1])
    # layer 2
    h = jnp.dot(w2_ref[...], h, preferred_element_type=jnp.float32)      # (HIDDEN, tb)
    h = jnp.tanh(h + bias_ref[:, 1:2])
    # output layer (output scaling folded into W3'/b3'; rows D_OUT..7 are zero)
    y = jnp.dot(w3_ref[...], h, preferred_element_type=jnp.float32)      # (D_OUT_PAD, tb)
    o_ref[...] = y + bias_ref[:D_OUT_PAD, 2:3]


def _choose_tiling(b):
    """Return (tb, grid). One step for small/medium batches; >=2 big steps otherwise."""
    if b <= SINGLE_STEP_MAX:
        return b, 1                               # block == full array (always legal)
    half = -(-b // 2)                             # ceil(b/2): >=2 steps for v7x megacore
    tb = min(TB_MAX, -(-half // LANE) * LANE)     # round up to lane multiple, cap
    grid = -(-b // tb)
    return tb, grid


@jax.jit
def dynamical_system_nn_forward(time, state_initial, d_dt_state_initial,
                                control_input, voltage_parametrisation, kparams):
    """JAX/Pallas equivalent of DynamicalSystemNN.forward (base-class assemble_* semantics)."""
    # assemble_NN_input (torch.hstack) + transpose to batch-on-lanes, fused by XLA.
    nn_input = jnp.concatenate(
        [time, state_initial, d_dt_state_initial, control_input, voltage_parametrisation],
        axis=1).astype(jnp.float32)
    b = nn_input.shape[0]
    x_t = nn_input.T                              # (D_IN, b)

    tb, grid = _choose_tiling(b)
    const2d = lambda i: (0, 0)

    out_t = pl.pallas_call(
        _mlp_kernel,
        grid=(grid,),
        in_specs=[
            pl.BlockSpec((D_IN, tb), lambda i: (0, i)),          # x tile (lane-dense)
            pl.BlockSpec((HIDDEN, D_IN), const2d),               # W1'^T (folded)
            pl.BlockSpec((HIDDEN, HIDDEN), const2d),             # W2^T
            pl.BlockSpec((D_OUT_PAD, HIDDEN), const2d),          # W3'^T (folded, padded rows)
            pl.BlockSpec((HIDDEN, 8), const2d),                  # packed biases (cols b1,b2,b3)
        ],
        out_specs=pl.BlockSpec((D_OUT_PAD, tb), lambda i: (0, i)),
        out_shape=jax.ShapeDtypeStruct((D_OUT_PAD, b), jnp.float32),
        compiler_params=pltpu.CompilerParams(dimension_semantics=("parallel",)),
    )(x_t, kparams["w1t"], kparams["w2t"], kparams["w3t"], kparams["bias_pack"])

    # assemble_prediction == hstack([NN_output]) == NN_output ; back to (b, D_OUT)
    return out_t[:D_OUT, :].T


# --------------------------- deterministic params ---------------------------
def init_raw_params(seed=0):
    key = jax.random.PRNGKey(seed)
    k1, k2, k3 = jax.random.split(key, 3)

    def linear_init(k, fan_in, fan_out):
        # PyTorch nn.Linear default: U(-1/sqrt(fan_in), 1/sqrt(fan_in))
        bound = 1.0 / jnp.sqrt(fan_in)
        kw, kb = jax.random.split(k)
        w = jax.random.uniform(kw, (fan_in, fan_out), jnp.float32, -bound, bound)
        b = jax.random.uniform(kb, (1, fan_out), jnp.float32, -bound, bound)
        return w, b

    w1, b1 = linear_init(k1, D_IN, HIDDEN)
    w2, b2 = linear_init(k2, HIDDEN, HIDDEN)
    w3, b3 = linear_init(k3, HIDDEN, D_OUT)

    # input standardisation / output scaling (deterministic, nontrivial)
    in_mean = 0.1 * jnp.arange(D_IN, dtype=jnp.float32).reshape(1, D_IN)
    in_std = 1.0 + 0.05 * jnp.arange(D_IN, dtype=jnp.float32).reshape(1, D_IN)
    out_mean = 0.2 * jnp.arange(D_OUT, dtype=jnp.float32).reshape(1, D_OUT)
    out_std = 1.0 + 0.1 * jnp.arange(D_OUT, dtype=jnp.float32).reshape(1, D_OUT)

    return dict(w1=w1, b1=b1, w2=w2, b2=b2, w3=w3, b3=b3,
                in_mean=in_mean, in_std=in_std, out_mean=out_mean, out_std=out_std)


def prepare_kernel_params(raw):
    """Fold standardisation/scaling into weights (exact in f32), transpose, pack biases."""
    istd = 1.0 / raw["in_std"]                                   # (1, D_IN)
    w1f = raw["w1"] * istd.T                                     # diag(1/std_in) @ W1
    b1f = raw["b1"] - (raw["in_mean"] * istd) @ raw["w1"]        # (1, HIDDEN)
    w3f = raw["w3"] * raw["out_std"]                             # W3 * std_out  (HIDDEN, D_OUT)
    b3f = raw["b3"] * raw["out_std"] + raw["out_mean"]           # (1, D_OUT)

    # transposed weights for batch-on-lanes layout
    w1t = w1f.T                                                  # (HIDDEN, D_IN)
    w2t = raw["w2"].T                                            # (HIDDEN, HIDDEN)
    # pad output rows with zeros -> padded output sublanes stay exactly 0
    w3t = jnp.zeros((D_OUT_PAD, HIDDEN), jnp.float32).at[:D_OUT, :].set(w3f.T)
    b3t = jnp.zeros((D_OUT_PAD, 1), jnp.float32).at[:D_OUT, :].set(b3f.T)

    # packed bias columns: col0 = b1', col1 = b2, col2 rows 0..7 = b3' (padded)
    bias_pack = jnp.zeros((HIDDEN, 8), jnp.float32)
    bias_pack = bias_pack.at[:, 0:1].set(b1f.T)
    bias_pack = bias_pack.at[:, 1:2].set(raw["b2"].T)
    bias_pack = bias_pack.at[:D_OUT_PAD, 2:3].set(b3t)

    return dict(w1t=w1t, w2t=w2t, w3t=w3t, bias_pack=bias_pack)


# ------------------------------ pure-JAX reference ---------------------------
def reference_forward(time, state_initial, d_dt_state_initial,
                      control_input, voltage_parametrisation, raw):
    x = jnp.concatenate(
        [time, state_initial, d_dt_state_initial, control_input, voltage_parametrisation],
        axis=1).astype(jnp.float32)
    h = (x - raw["in_mean"]) / raw["in_std"]
    h = jnp.tanh(h @ raw["w1"] + raw["b1"])
    h = jnp.tanh(h @ raw["w2"] + raw["b2"])
    y = h @ raw["w3"] + raw["b3"]
    return y * raw["out_std"] + raw["out_mean"]


if __name__ == "__main__":
    B = 16
    key = jax.random.PRNGKey(0)
    kt, ks, kd, kc, kv = jax.random.split(key, 5)
    time = jax.random.uniform(kt, (B, 1), jnp.float32, 0.0, 1.0)
    state_initial = jax.random.normal(ks, (B, N_STATES), jnp.float32)
    d_dt_state_initial = jax.random.normal(kd, (B, N_STATES), jnp.float32)
    control_input = jax.random.normal(kc, (B, N_CTRL), jnp.float32)
    voltage_parametrisation = jax.random.normal(kv, (B, N_VPARAM), jnp.float32)

    raw = init_raw_params(seed=0)
    kparams = prepare_kernel_params(raw)

    pred = dynamical_system_nn_forward(time, state_initial, d_dt_state_initial,
                                       control_input, voltage_parametrisation, kparams)
    pred = jax.block_until_ready(pred)

    ref = reference_forward(time, state_initial, d_dt_state_initial,
                            control_input, voltage_parametrisation, raw)
    assert pred.shape == (B, D_OUT)
    # f32 MXU operands -> tight tolerance (only accumulation-order / folding rounding)
    assert jnp.allclose(pred, ref, atol=1e-4, rtol=1e-4), "mismatch vs reference"

    # TODO(synk): forward_dt / predict_current / jacobians (autograd JVP + component physics)
    # are outside the NN hot path and are not reproduced here.
    print("KERNEL_OK")
</pallas_src>

<mosaic_0001>
module attributes {stable_mosaic.version = 11 : i64} {
  func.func @_mlp_kernel(%arg0: i32, %arg1: memref<8x16xf32, #tpu.memory_space<vmem>>, %arg2: memref<32x8xf32, #tpu.memory_space<vmem>>, %arg3: memref<32x32xf32, #tpu.memory_space<vmem>>, %arg4: memref<8x32xf32, #tpu.memory_space<vmem>>, %arg5: memref<32x8xf32, #tpu.memory_space<vmem>>, %arg6: memref<8x16xf32, #tpu.memory_space<vmem>>) attributes {dimension_semantics = [#tpu.dimension_semantics<parallel>], iteration_bounds = array<i64: 1>, scalar_prefetch = 0 : i64, scratch_operands = 0 : i64, tpu.core_type = #tpu.core_type<tc>, window_params = [{transform_indices = @transform_0, window_bounds = array<i64: 8, 16>}, {pipeline_mode = #tpu.pipeline_mode<synchronous>, transform_indices = @transform_1, window_bounds = array<i64: 32, 8>}, {pipeline_mode = #tpu.pipeline_mode<synchronous>, transform_indices = @transform_2, window_bounds = array<i64: 32, 32>}, {pipeline_mode = #tpu.pipeline_mode<synchronous>, transform_indices = @transform_3, window_bounds = array<i64: 8, 32>}, {pipeline_mode = #tpu.pipeline_mode<synchronous>, transform_indices = @transform_4, window_bounds = array<i64: 32, 8>}, {transform_indices = @transform_5, window_bounds = array<i64: 8, 16>}]} {
    %c0 = arith.constant 0 : index
    %c0_0 = arith.constant 0 : index
    %0 = vector.load %arg1[%c0, %c0_0] : memref<8x16xf32, #tpu.memory_space<vmem>>, vector<8x16xf32>
    %c0_1 = arith.constant 0 : index
    %c0_2 = arith.constant 0 : index
    %1 = vector.load %arg2[%c0_1, %c0_2] : memref<32x8xf32, #tpu.memory_space<vmem>>, vector<32x8xf32>
    %cst = arith.constant dense<0.000000e+00> : vector<32x16xf32>
    %2 = tpu.matmul %1, %0, %cst {dimension_numbers = #tpu.dot_dimension_numbers<[1], [0], [0], [1], [0, 0, 1, 1], [], []>} : vector<32x8xf32>, vector<8x16xf32>, vector<32x16xf32> -> vector<32x16xf32>
    %c0_3 = arith.constant 0 : index
    %c0_4 = arith.constant 0 : index
    %3 = vector.load %arg5[%c0_3, %c0_4] : memref<32x8xf32, #tpu.memory_space<vmem>>, vector<32x1xf32>
    %4 = vector.broadcast %3 : vector<32x1xf32> to vector<32x16xf32>
    %5 = arith.addf %2, %4 : vector<32x16xf32>
    %6 = math.tanh %5 : vector<32x16xf32>
    %c0_5 = arith.constant 0 : index
    %c0_6 = arith.constant 0 : index
    %7 = vector.load %arg3[%c0_5, %c0_6] : memref<32x32xf32, #tpu.memory_space<vmem>>, vector<32x32xf32>
    %cst_7 = arith.constant dense<0.000000e+00> : vector<32x16xf32>
    %8 = tpu.matmul %7, %6, %cst_7 {dimension_numbers = #tpu.dot_dimension_numbers<[1], [0], [0], [1], [0, 0, 1, 1], [], []>} : vector<32x32xf32>, vector<32x16xf32>, vector<32x16xf32> -> vector<32x16xf32>
    %c0_8 = arith.constant 0 : index
    %c1 = arith.constant 1 : index
    %9 = vector.load %arg5[%c0_8, %c1] : memref<32x8xf32, #tpu.memory_space<vmem>>, vector<32x1xf32>
    %10 = vector.broadcast %9 : vector<32x1xf32> to vector<32x16xf32>
    %11 = arith.addf %8, %10 : vector<32x16xf32>
    %12 = math.tanh %11 : vector<32x16xf32>
    %c0_9 = arith.constant 0 : index
    %c0_10 = arith.constant 0 : index
    %13 = vector.load %arg4[%c0_9, %c0_10] : memref<8x32xf32, #tpu.memory_space<vmem>>, vector<8x32xf32>
    %cst_11 = arith.constant dense<0.000000e+00> : vector<8x16xf32>
    %14 = tpu.matmul %13, %12, %cst_11 {dimension_numbers = #tpu.dot_dimension_numbers<[1], [0], [0], [1], [0, 0, 1, 1], [], []>} : vector<8x32xf32>, vector<32x16xf32>, vector<8x16xf32> -> vector<8x16xf32>
    %c0_12 = arith.constant 0 : index
    %c2 = arith.constant 2 : index
    %15 = vector.load %arg5[%c0_12, %c2] : memref<32x8xf32, #tpu.memory_space<vmem>>, vector<8x1xf32>
    %16 = vector.broadcast %15 : vector<8x1xf32> to vector<8x16xf32>
    %17 = arith.addf %14, %16 : vector<8x16xf32>
    %c0_13 = arith.constant 0 : index
    %c0_14 = arith.constant 0 : index
    %18 = vector.load %arg6[%c0_13, %c0_14] : memref<8x16xf32, #tpu.memory_space<vmem>>, vector<8x16xf32>
    tpu.vector_store %arg6[%c0_13, %c0_14], %17 {strides = array<i32>} : memref<8x16xf32, #tpu.memory_space<vmem>>, vector<8x16xf32>,
    return
  }
  func.func @transform_0(%arg0: i32) -> (i32, i32) {
    %c0_i32 = arith.constant 0 : i32
    %c0_i32_0 = arith.constant 0 : i32
    return %c0_i32, %arg0 : i32, i32
  }
  func.func @transform_1(%arg0: i32) -> (i32, i32) {
    %c0_i32 = arith.constant 0 : i32
    %c0_i32_0 = arith.constant 0 : i32
    %c0_i32_1 = arith.constant 0 : i32
    return %c0_i32, %c0_i32_0 : i32, i32
  }
  func.func @transform_2(%arg0: i32) -> (i32, i32) {
    %c0_i32 = arith.constant 0 : i32
    %c0_i32_0 = arith.constant 0 : i32
    %c0_i32_1 = arith.constant 0 : i32
    return %c0_i32, %c0_i32_0 : i32, i32
  }
  func.func @transform_3(%arg0: i32) -> (i32, i32) {
    %c0_i32 = arith.constant 0 : i32
    %c0_i32_0 = arith.constant 0 : i32
    %c0_i32_1 = arith.constant 0 : i32
    return %c0_i32, %c0_i32_0 : i32, i32
  }
  func.func @transform_4(%arg0: i32) -> (i32, i32) {
    %c0_i32 = arith.constant 0 : i32
    %c0_i32_0 = arith.constant 0 : i32
    %c0_i32_1 = arith.constant 0 : i32
    return %c0_i32, %c0_i32_0 : i32, i32
  }
  func.func @transform_5(%arg0: i32) -> (i32, i32) {
    %c0_i32 = arith.constant 0 : i32
    %c0_i32_0 = arith.constant 0 : i32
    return %c0_i32, %arg0 : i32, i32
  }
}

</mosaic_0001>

<llo_original>
// kernel: dynamical_system_nn_forward.1
$region0: #{dynamical_system_nn_forward.1}
  #allocation0 [shape = 'u32[]', space=smem, size = 0x4, offset = 0x4, fixed_abs, tag = 'smem constant byte address 0x4 - core index']
  #allocation1 [shape = 'u32[72,128]{1,0:T(1,128)}', space=vmem, size = 0x9000, scoped, tag = 'internal scratch']
  %s0 = inlined_call_operand.vmem [shape: f32[8,16], index: 0, kind: input, shape index: {}]
  %s1 = inlined_call_operand.vmem [shape: f32[32,8], index: 1, kind: input, shape index: {}]
  %s2 = inlined_call_operand.vmem [shape: f32[32,32], index: 2, kind: input, shape index: {}]
  %s3 = inlined_call_operand.vmem [shape: f32[8,32], index: 3, kind: input, shape index: {}]
  %s4 = inlined_call_operand.vmem [shape: f32[32,8], index: 4, kind: input, shape index: {}]
  %s5 = inlined_call_operand.vmem [shape: f32[8,16], index: 5, kind: output, shape index: {}]
  %s6 = sld [smem:[#allocation0]]
  $region30: #{dynamical_system_nn_forward.1} parent=0
    _
  %s8 = ssub.s32 1, %s6
  %s9 = scalar_select 0, %s8, %s6
  // Predicated region
  $region2: #{dynamical_system_nn_forward.1} parent=0 // pred_check
    _
  $region3: #{dynamical_system_nn_forward.1} parent=0 // pred_check_branch
    %11 = sbr.rel (0) target = $region5
  $region4: #{dynamical_system_nn_forward.1} parent=0 // pred_region
    _
  $region5: #{dynamical_system_nn_forward.1} parent=0 // pred_fallthru
    _
  // Predicated region
  $region6: #{dynamical_system_nn_forward.1} parent=0 // pred_check
    _
  $region7: #{dynamical_system_nn_forward.1} parent=0 // pred_check_branch
    %13 = sbr.rel (0) target = $region9
  $region8: #{dynamical_system_nn_forward.1} parent=0 // pred_region
    _
  $region9: #{dynamical_system_nn_forward.1} parent=0 // pred_fallthru
    _
  // Predicated region
  $region10: #{dynamical_system_nn_forward.1} parent=0 // pred_check
    _
  $region11: #{dynamical_system_nn_forward.1} parent=0 // pred_check_branch
    %15 = sbr.rel (0) target = $region13
  $region12: #{dynamical_system_nn_forward.1} parent=0 // pred_region
    _
  $region13: #{dynamical_system_nn_forward.1} parent=0 // pred_fallthru
    _
  // Predicated region
  $region14: #{dynamical_system_nn_forward.1} parent=0 // pred_check
    _
  $region15: #{dynamical_system_nn_forward.1} parent=0 // pred_check_branch
    %17 = sbr.rel (0) target = $region17
  $region16: #{dynamical_system_nn_forward.1} parent=0 // pred_region
    _
  $region17: #{dynamical_system_nn_forward.1} parent=0 // pred_fallthru
    _
  // Predicated region
  $region18: #{dynamical_system_nn_forward.1} parent=0 // pred_check
    _
  $region19: #{dynamical_system_nn_forward.1} parent=0 // pred_check_branch
    %19 = sbr.rel (0) target = $region21
  $region20: #{dynamical_system_nn_forward.1} parent=0 // pred_region
    _
  $region21: #{dynamical_system_nn_forward.1} parent=0 // pred_fallthru
    _
  %v20 = vld [vmem:[%s0] sm:$0xff]
  %v21 = vld [vmem:[%s1] sm:$0xff]
  %v22 = vld [vmem:[%s1 + $0x8] sm:$0xff]
  %v23 = vld [vmem:[%s1 + $0x10] sm:$0xff]
  %v24 = vld [vmem:[%s1 + $0x18] sm:$0xff]
  %v25 = vld [vmem:[%s4] sm:$0xff]
  %v26 = vld [vmem:[%s4 + $0x8] sm:$0xff]
  %v27 = vld [vmem:[%s4 + $0x10] sm:$0xff]
  %v28 = vld [vmem:[%s4 + $0x18] sm:$0xff]
  %30 = vset.pattern.permute.xlu0 0
  %31 = vperm.xlu0 %30, %v25
  %v32 = vpop.permute.xlu0 %31
  %35 = vset.pattern.permute.xlu0 0
  %36 = vperm.xlu0 %35, %v26
  %v37 = vpop.permute.xlu0 %36
  %40 = vset.pattern.permute.xlu0 0
  %41 = vperm.xlu0 %40, %v27
  %v42 = vpop.permute.xlu0 %41
  %45 = vset.pattern.permute.xlu0 0
  %46 = vperm.xlu0 %45, %v28
  %v47 = vpop.permute.xlu0 %46
  %vm49 = vcmask 64512
  %v51 = vsel %vm49, %v21, 0
  %v54 = vsel %vm49, %v22, 0
  %v57 = vsel %vm49, %v23, 0
  %v60 = vsel %vm49, %v24, 0
  %62 = vmatpush.msra.mxu0 0.0
  %63 = vmatpush.msra.mxu0 0.0
  %64 = vmatpush.msra.mxu0 0.0
  %65 = vmatpush.msra.mxu0 0.0
  %66 = vmatpush.msra.mxu0 0.0
  %67 = vmatpush.msra.mxu0 0.0
  %68 = vmatpush.msra.mxu0 0.0
  %69 = vmatpush.msra.mxu0 0.0
  %70 = vmatpush.msra.mxu0 0.0
  %71 = vmatpush.msra.mxu0 0.0
  %72 = vmatpush.msra.mxu0 0.0
  %73 = vmatpush.msra.mxu0 0.0
  %74 = vmatpush.msra.mxu0 0.0
  %75 = vmatpush.msra.mxu0 0.0
  %76 = vmatpush.msra.mxu0 0.0
  %77 = vmatpush.msra.mxu0 %v20
  %78 = vmatmul.f32.gmra.mxu0 %v51
  %v79 = vpop.f32.mrf.mxu0
  %v80 = vadd.f32 %v32, %v79
  %81 = vmatmul.f32.gmra.mxu0 %v54
  %v82 = vpop.f32.mrf.mxu0
  %v83 = vadd.f32 %v37, %v82
  %84 = vmatmul.f32.gmra.mxu0 %v57
  %v85 = vpop.f32.mrf.mxu0
  %v86 = vadd.f32 %v42, %v85
  %87 = vmatmul.f32.gmra.mxu0 %v60
  %v88 = vpop.f32.mrf.mxu0
  %v89 = vadd.f32 %v47, %v88
  %90 = vdwg.mxu0
  %v91 = vtanh.pop %v80
  %v92 = vtanh.pop %v83
  %v93 = vtanh.pop %v86
  %v94 = vtanh.pop %v89
  %v95 = vld [vmem:[%s2] sm:$0xff]
  %v96 = vld [vmem:[%s2 + $0x8] sm:$0xff]
  %v97 = vld [vmem:[%s2 + $0x10] sm:$0xff]
  %v98 = vld [vmem:[%s2 + $0x18] sm:$0xff]
  %99 = vset.pattern.permute.xlu0 1
  %100 = vperm.xlu0 %99, %v25
  %v101 = vpop.permute.xlu0 %100
  %103 = vset.pattern.permute.xlu0 1
  %104 = vperm.xlu0 %103, %v26
  %v105 = vpop.permute.xlu0 %104
  %107 = vset.pattern.permute.xlu0 1
  %108 = vperm.xlu0 %107, %v27
  %v109 = vpop.permute.xlu0 %108
  %111 = vset.pattern.permute.xlu0 1
  %112 = vperm.xlu0 %111, %v28
  %v113 = vpop.permute.xlu0 %112
  %vm115 = vcmask 261120
  %v117 = vsel %vm115, %v95, 0
  %v120 = vsel %vm115, %v96, 0
  %v123 = vsel %vm115, %v97, 0
  %v126 = vsel %vm115, %v98, 0
  %128 = vmatpush.msra.mxu0 0.0
  %129 = vmatpush.msra.mxu0 0.0
  %130 = vmatpush.msra.mxu0 0.0
  %131 = vmatpush.msra.mxu0 0.0
  %132 = vmatpush.msra.mxu0 0.0
  %133 = vmatpush.msra.mxu0 0.0
  %134 = vmatpush.msra.mxu0 0.0
  %135 = vmatpush.msra.mxu0 0.0
  %136 = vmatpush.msra.mxu0 0.0
  %137 = vmatpush.msra.mxu0 0.0
  %138 = vmatpush.msra.mxu0 0.0
  %139 = vmatpush.msra.mxu0 0.0
  %140 = vmatpush.msra.mxu0 %v94
  %141 = vmatpush.msra.mxu0 %v93
  %142 = vmatpush.msra.mxu0 %v92
  %143 = vmatpush.msra.mxu0 %v91
  %144 = vmatmul.f32.gmra.mxu0 %v117
  %v145 = vpop.f32.mrf.mxu0
  %v146 = vadd.f32 %v101, %v145
  %147 = vmatmul.f32.gmra.mxu0 %v120
  %v148 = vpop.f32.mrf.mxu0
  %v149 = vadd.f32 %v105, %v148
  %150 = vmatmul.f32.gmra.mxu0 %v123
  %v151 = vpop.f32.mrf.mxu0
  %v152 = vadd.f32 %v109, %v151
  %153 = vmatmul.f32.gmra.mxu0 %v126
  %v154 = vpop.f32.mrf.mxu0
  %v155 = vadd.f32 %v113, %v154
  %156 = vdwg.mxu0
  %v157 = vtanh.pop %v146
  %v158 = vtanh.pop %v149
  %v159 = vtanh.pop %v152
  %v160 = vtanh.pop %v155
  %v161 = vld [vmem:[%s3] sm:$0xff]
  %v162 = vld [vmem:[%s4] sm:$0xff]
  %164 = vset.pattern.permute.xlu0 2
  %165 = vperm.xlu0 %164, %v162
  %v166 = vpop.permute.xlu0 %165
  %v169 = vsel %vm115, %v161, 0
  %171 = vmatpush.msra.mxu0 0.0
  %172 = vmatpush.msra.mxu0 0.0
  %173 = vmatpush.msra.mxu0 0.0
  %174 = vmatpush.msra.mxu0 0.0
  %175 = vmatpush.msra.mxu0 0.0
  %176 = vmatpush.msra.mxu0 0.0
  %177 = vmatpush.msra.mxu0 0.0
  %178 = vmatpush.msra.mxu0 0.0
  %179 = vmatpush.msra.mxu0 0.0
  %180 = vmatpush.msra.mxu0 0.0
  %181 = vmatpush.msra.mxu0 0.0
  %182 = vmatpush.msra.mxu0 0.0
  %183 = vmatpush.msra.mxu0 %v160
  %184 = vmatpush.msra.mxu0 %v159
  %185 = vmatpush.msra.mxu0 %v158
  %186 = vmatpush.msra.mxu0 %v157
  %187 = vmatmul.f32.gmra.mxu0 %v169
  %v188 = vpop.f32.mrf.mxu0
  %v189 = vadd.f32 %v166, %v188
  %190 = vdwg.mxu0
  %vm191 = vcmask 130048
  %192 = vst.msk [vmem:[%s5] sm:$0xff] %vm191, %v189
  // Predicated region
  $region22: #{dynamical_system_nn_forward.1} parent=0 // pred_check
    _
  $region23: #{dynamical_system_nn_forward.1} parent=0 // pred_check_branch
    %194 = sbr.rel (0) target = $region25
  $region24: #{dynamical_system_nn_forward.1} parent=0 // pred_region
    _
  $region25: #{dynamical_system_nn_forward.1} parent=0 // pred_fallthru
    _
  // Predicated region
  $region26: #{dynamical_system_nn_forward.1} parent=0 // pred_check
    _
  $region27: #{dynamical_system_nn_forward.1} parent=0 // pred_check_branch
    %196 = sbr.rel (0) target = $region29
  $region28: #{dynamical_system_nn_forward.1} parent=0 // pred_region
    _
  $region29: #{dynamical_system_nn_forward.1} parent=0 // pred_fallthru
    _

</llo_original>
